<compile_context>
chip_gen: v7x
topology: tpu7x:2x2x1
jax: 0.10.0
libtpu: 0.0.40
codegen_flags: <defaults>
</compile_context>

<pallas_src>
import jax
import jax.numpy as jnp
from jax.experimental import pallas as pl
from jax.experimental.pallas import tpu as pltpu

_LANE = 128
_VMEM_LIMIT = 48 * 1024 * 1024  # fits v7x's 64 MiB physical VMEM with headroom


def _round_up(x, m):
    return ((x + m - 1) // m) * m


# ---------------------------------------------------------------------------
# One SAGEConv layer:  out = relu( (A @ H) @ W_l + H @ W_r + b )
# expressed as a single stacked GEMM  [A@H | H] @ [W_l ; W_r]  per row tile.
# ---------------------------------------------------------------------------
def _sage_layer_kernel(a_ref, hfull_ref, htile_ref, w_ref, b_ref, out_ref):
    # a_ref:     (TM, N_pad)        bf16   row block of normalized adjacency
    # hfull_ref: (N_pad, C_prev)    bf16   full previous-layer features
    # htile_ref: (TM, C_prev)       bf16   this tile's root features
    # w_ref:     (2*C_prev, C_out)  bf16   stacked [W_l ; W_r]
    # b_ref:     (1, C_out)         f32
    agg = jnp.dot(a_ref[...], hfull_ref[...],
                  preferred_element_type=jnp.float32)          # mean aggregation
    stacked = jnp.concatenate(
        [agg.astype(jnp.bfloat16), htile_ref[...]], axis=-1)    # (TM, 2*C_prev)
    h = jnp.dot(stacked, w_ref[...],
                preferred_element_type=jnp.float32) + b_ref[...]
    out_ref[...] = jnp.maximum(h, 0.0).astype(out_ref.dtype)    # ReLU


def _sage_layer(adj, h, w_stack, b, *, tm):
    n_pad = adj.shape[0]
    c_prev = h.shape[1]
    c_out = w_stack.shape[1]
    grid = (n_pad // tm,)
    return pl.pallas_call(
        _sage_layer_kernel,
        out_shape=jax.ShapeDtypeStruct((n_pad, c_out), jnp.bfloat16),
        grid=grid,
        in_specs=[
            pl.BlockSpec((tm, n_pad), lambda i: (i, 0)),        # A row block
            pl.BlockSpec((n_pad, c_prev), lambda i: (0, 0)),    # full H (fetched once)
            pl.BlockSpec((tm, c_prev), lambda i: (i, 0)),       # H tile (root term)
            pl.BlockSpec((2 * c_prev, c_out), lambda i: (0, 0)),
            pl.BlockSpec((1, c_out), lambda i: (0, 0)),
        ],
        out_specs=pl.BlockSpec((tm, c_out), lambda i: (i, 0)),
        compiler_params=pltpu.CompilerParams(
            dimension_semantics=("parallel",),
            vmem_limit_bytes=_VMEM_LIMIT,
        ),
    )(adj, h, h, w_stack, b)


# ---------------------------------------------------------------------------
# Final Linear over concat(xs) without materializing the concat:
#   out = sum_k xs[k] @ W_f[rows_k] + b_f     (f32 accumulation)
# ---------------------------------------------------------------------------
def _make_final_kernel(n_seg):
    def kernel(*refs):
        xs = refs[:n_seg]
        ws = refs[n_seg:2 * n_seg]
        b_ref = refs[2 * n_seg]
        out_ref = refs[2 * n_seg + 1]
        acc = jnp.dot(xs[0][...], ws[0][...], preferred_element_type=jnp.float32)
        for k in range(1, n_seg):
            acc = acc + jnp.dot(xs[k][...], ws[k][...],
                                preferred_element_type=jnp.float32)
        out_ref[...] = acc + b_ref[...]
    return kernel


def _final_linear(segments, wf_segs, bf, *, tm):
    n_pad = segments[0].shape[0]
    c_f = wf_segs[0].shape[1]
    n_seg = len(segments)
    grid = (n_pad // tm,)
    in_specs = []
    for s in segments:
        in_specs.append(pl.BlockSpec((tm, s.shape[1]), lambda i: (i, 0)))
    for w in wf_segs:
        in_specs.append(pl.BlockSpec(w.shape, lambda i: (0, 0)))
    in_specs.append(pl.BlockSpec((1, c_f), lambda i: (0, 0)))
    return pl.pallas_call(
        _make_final_kernel(n_seg),
        out_shape=jax.ShapeDtypeStruct((n_pad, c_f), jnp.float32),
        grid=grid,
        in_specs=in_specs,
        out_specs=pl.BlockSpec((tm, c_f), lambda i: (i, 0)),
        compiler_params=pltpu.CompilerParams(
            dimension_semantics=("parallel",),
            vmem_limit_bytes=_VMEM_LIMIT,
        ),
    )(*segments, *wf_segs, bf)


# ---------------------------------------------------------------------------
# Full forward pass.
# ---------------------------------------------------------------------------
def graphsage_forward(x, edge_index, params, *, num_layers, cat=True, lin=True,
                      tm=256):
    """x: [N, C_in] f32, edge_index: [2, E] int32 (row 0 = src, row 1 = dst)."""
    N, in_ch = x.shape
    out_ch = params["convs"][0][0].shape[1]

    # Row-tile size (multiple of 16 for bf16 sublane packing) and padded N.
    TM = min(tm, _round_up(N, 16))
    n_pad = _round_up(N, TM)

    c_in_pad = _round_up(in_ch, _LANE)
    c_hid_pad = _round_up(out_ch, _LANE)

    # --- Glue (plain JAX): dense row-normalized adjacency. Row i averages
    # features of source nodes j for every edge j -> i; isolated nodes get a
    # zero row (matches PyG scatter-mean default of 0). Cast to bf16 after
    # normalizing in f32; padded rows/cols are zero so they never contaminate
    # real nodes.
    src, dst = edge_index[0], edge_index[1]
    adj = jnp.zeros((N, N), jnp.float32).at[dst, src].add(1.0)
    deg = jnp.sum(adj, axis=-1, keepdims=True)
    adj = adj / jnp.maximum(deg, 1.0)
    adj = jnp.pad(adj, ((0, n_pad - N), (0, n_pad - N))).astype(jnp.bfloat16)

    h0 = jnp.pad(x, ((0, n_pad - N), (0, c_in_pad - in_ch))).astype(jnp.bfloat16)

    xs = [h0]
    widths = [in_ch]
    c_prev, c_prev_pad = in_ch, c_in_pad
    for (wl, wr, bl) in params["convs"]:
        w_stack = jnp.concatenate(
            [jnp.pad(wl, ((0, c_prev_pad - c_prev), (0, c_hid_pad - out_ch))),
             jnp.pad(wr, ((0, c_prev_pad - c_prev), (0, c_hid_pad - out_ch)))],
            axis=0).astype(jnp.bfloat16)                       # (2*Cprev_pad, Cout_pad)
        b_pad = jnp.pad(bl, ((0, 0), (0, c_hid_pad - out_ch))).astype(jnp.float32)
        h = _sage_layer(adj, xs[-1], w_stack, b_pad, tm=TM)
        xs.append(h)
        widths.append(out_ch)
        c_prev, c_prev_pad = out_ch, c_hid_pad

    # F.dropout(p=0.0) is the identity, nothing to do.

    if lin:
        segs = xs if cat else [xs[-1]]
        seg_widths = widths if cat else [widths[-1]]
        wf, bf = params["final_w"], params["final_b"]
        final_out = wf.shape[1]
        c_f_pad = _round_up(final_out, _LANE)
        wf_segs = []
        off = 0
        for s, w_true in zip(segs, seg_widths):
            cp = s.shape[1]
            wseg = wf[off:off + w_true, :]
            wseg = jnp.pad(
                wseg, ((0, cp - w_true), (0, c_f_pad - final_out))
            ).astype(jnp.bfloat16)
            wf_segs.append(wseg)
            off += w_true
        bf_pad = jnp.pad(bf, ((0, 0), (0, c_f_pad - final_out))).astype(jnp.float32)
        out = _final_linear(segs, wf_segs, bf_pad, tm=TM)
        return out[:N, :final_out]

    # lin=False paths: just strip padding (glue only).
    if cat:
        pieces = [s[:N, :w].astype(jnp.float32) for s, w in zip(xs, widths)]
        return jnp.concatenate(pieces, axis=-1)
    return xs[-1][:N, :out_ch].astype(jnp.float32)


def init_graphsage_params(key, in_channels, out_channels, num_layers,
                          lin=True, cat=True):
    """Deterministic synthetic parameters matching GraphSAGE.__init__ shapes.

    Per SAGEConv layer: lin_l (weight + bias) on aggregated neighbors, lin_r
    (weight only) on root. Stored pre-transposed as [C_in, C_out].
    """
    params = {"convs": []}
    c_prev = in_channels
    for _ in range(num_layers):
        key, k1, k2, k3 = jax.random.split(key, 4)
        bound = 1.0 / jnp.sqrt(jnp.float32(c_prev))
        wl = jax.random.uniform(k1, (c_prev, out_channels), jnp.float32, -bound, bound)
        wr = jax.random.uniform(k2, (c_prev, out_channels), jnp.float32, -bound, bound)
        bl = jax.random.uniform(k3, (1, out_channels), jnp.float32, -bound, bound)
        params["convs"].append((wl, wr, bl))
        c_prev = out_channels
    if lin:
        cat_ch = in_channels + num_layers * out_channels if cat else out_channels
        key, k1, k2 = jax.random.split(key, 3)
        bound = 1.0 / jnp.sqrt(jnp.float32(cat_ch))
        params["final_w"] = jax.random.uniform(
            k1, (cat_ch, out_channels), jnp.float32, -bound, bound)
        params["final_b"] = jax.random.uniform(
            k2, (1, out_channels), jnp.float32, -bound, bound)
    return params


if __name__ == "__main__":
    # Small deterministic example: 32 nodes, 16 input features, 64 edges,
    # GraphSAGE(in=16, out=32, dim unused by forward, num_layers=2, cat=True, lin=True).
    N, E = 32, 64
    IN_CH, OUT_CH, NUM_LAYERS = 16, 32, 2

    key = jax.random.PRNGKey(0)
    kx, ke_src, ke_dst, kp, ka = jax.random.split(key, 5)

    x = jax.random.normal(kx, (N, IN_CH), jnp.float32)
    edge_index = jnp.stack([
        jax.random.randint(ke_src, (E,), 0, N, jnp.int32),
        jax.random.randint(ke_dst, (E,), 0, N, jnp.int32),
    ])
    edge_attr = jax.random.normal(ka, (E, 4), jnp.float32)  # unused by forward (matches PyTorch)

    params = init_graphsage_params(kp, IN_CH, OUT_CH, NUM_LAYERS, lin=True, cat=True)

    out = graphsage_forward(x, edge_index, params,
                            num_layers=NUM_LAYERS, cat=True, lin=True)
    out = jax.block_until_ready(out)
    assert out.shape == (N, OUT_CH), out.shape
    assert bool(jnp.all(jnp.isfinite(out)))
    print("KERNEL_OK")
</pallas_src>

<mosaic_0001>
module attributes {stable_mosaic.version = 11 : i64} {
  func.func @_sage_layer_kernel(%arg0: i32, %arg1: memref<32x32xbf16, #tpu.memory_space<vmem>>, %arg2: memref<32x128xbf16, #tpu.memory_space<vmem>>, %arg3: memref<32x128xbf16, #tpu.memory_space<vmem>>, %arg4: memref<256x128xbf16, #tpu.memory_space<vmem>>, %arg5: memref<1x128xf32, #tpu.memory_space<vmem>>, %arg6: memref<32x128xbf16, #tpu.memory_space<vmem>>) attributes {dimension_semantics = [#tpu.dimension_semantics<parallel>], iteration_bounds = array<i64: 1>, scalar_prefetch = 0 : i64, scratch_operands = 0 : i64, tpu.core_type = #tpu.core_type<tc>, window_params = [{transform_indices = @transform_0, window_bounds = array<i64: 32, 32>}, {pipeline_mode = #tpu.pipeline_mode<synchronous>, transform_indices = @transform_1, window_bounds = array<i64: 32, 128>}, {transform_indices = @transform_2, window_bounds = array<i64: 32, 128>}, {pipeline_mode = #tpu.pipeline_mode<synchronous>, transform_indices = @transform_3, window_bounds = array<i64: 256, 128>}, {pipeline_mode = #tpu.pipeline_mode<synchronous>, transform_indices = @transform_4, window_bounds = array<i64: 1, 128>}, {transform_indices = @transform_5, window_bounds = array<i64: 32, 128>}]} {
    %c0 = arith.constant 0 : index
    %c0_0 = arith.constant 0 : index
    %0 = vector.load %arg1[%c0, %c0_0] : memref<32x32xbf16, #tpu.memory_space<vmem>>, vector<32x32xbf16>
    %c0_1 = arith.constant 0 : index
    %c0_2 = arith.constant 0 : index
    %1 = vector.load %arg2[%c0_1, %c0_2] : memref<32x128xbf16, #tpu.memory_space<vmem>>, vector<32x128xbf16>
    %cst = arith.constant dense<0.000000e+00> : vector<32x128xf32>
    %2 = tpu.matmul %0, %1, %cst {dimension_numbers = #tpu.dot_dimension_numbers<[1], [0], [0], [1], [0, 0, 1, 1], [], []>} : vector<32x32xbf16>, vector<32x128xbf16>, vector<32x128xf32> -> vector<32x128xf32>
    %3 = arith.truncf %2 : vector<32x128xf32> to vector<32x128xbf16>
    %c0_3 = arith.constant 0 : index
    %c0_4 = arith.constant 0 : index
    %4 = vector.load %arg3[%c0_3, %c0_4] : memref<32x128xbf16, #tpu.memory_space<vmem>>, vector<32x128xbf16>
    %5 = tpu.concatenate %3, %4 in 1 : vector<32x128xbf16>, vector<32x128xbf16> -> vector<32x256xbf16>
    %c0_5 = arith.constant 0 : index
    %c0_6 = arith.constant 0 : index
    %6 = vector.load %arg4[%c0_5, %c0_6] : memref<256x128xbf16, #tpu.memory_space<vmem>>, vector<256x128xbf16>
    %cst_7 = arith.constant dense<0.000000e+00> : vector<32x128xf32>
    %7 = tpu.matmul %5, %6, %cst_7 {dimension_numbers = #tpu.dot_dimension_numbers<[1], [0], [0], [1], [0, 0, 1, 1], [], []>} : vector<32x256xbf16>, vector<256x128xbf16>, vector<32x128xf32> -> vector<32x128xf32>
    %c0_8 = arith.constant 0 : index
    %c0_9 = arith.constant 0 : index
    %8 = vector.load %arg5[%c0_8, %c0_9] : memref<1x128xf32, #tpu.memory_space<vmem>>, vector<1x128xf32>
    %9 = vector.broadcast %8 : vector<1x128xf32> to vector<32x128xf32>
    %10 = arith.addf %7, %9 : vector<32x128xf32>
    %cst_10 = arith.constant 0.000000e+00 : f32
    %11 = vector.broadcast %cst_10 : f32 to vector<32x128xf32>
    %12 = arith.maximumf %10, %11 : vector<32x128xf32>
    %13 = arith.truncf %12 : vector<32x128xf32> to vector<32x128xbf16>
    %c0_11 = arith.constant 0 : index
    %c0_12 = arith.constant 0 : index
    %14 = vector.load %arg6[%c0_11, %c0_12] : memref<32x128xbf16, #tpu.memory_space<vmem>>, vector<32x128xbf16>
    tpu.vector_store %arg6[%c0_11, %c0_12], %13 {strides = array<i32>} : memref<32x128xbf16, #tpu.memory_space<vmem>>, vector<32x128xbf16>,
    return
  }
  func.func @transform_0(%arg0: i32) -> (i32, i32) {
    %c0_i32 = arith.constant 0 : i32
    %c0_i32_0 = arith.constant 0 : i32
    return %arg0, %c0_i32 : i32, i32
  }
  func.func @transform_1(%arg0: i32) -> (i32, i32) {
    %c0_i32 = arith.constant 0 : i32
    %c0_i32_0 = arith.constant 0 : i32
    %c0_i32_1 = arith.constant 0 : i32
    return %c0_i32, %c0_i32_0 : i32, i32
  }
  func.func @transform_2(%arg0: i32) -> (i32, i32) {
    %c0_i32 = arith.constant 0 : i32
    %c0_i32_0 = arith.constant 0 : i32
    return %arg0, %c0_i32 : i32, i32
  }
  func.func @transform_3(%arg0: i32) -> (i32, i32) {
    %c0_i32 = arith.constant 0 : i32
    %c0_i32_0 = arith.constant 0 : i32
    %c0_i32_1 = arith.constant 0 : i32
    return %c0_i32, %c0_i32_0 : i32, i32
  }
  func.func @transform_4(%arg0: i32) -> (i32, i32) {
    %c0_i32 = arith.constant 0 : i32
    %c0_i32_0 = arith.constant 0 : i32
    %c0_i32_1 = arith.constant 0 : i32
    return %c0_i32, %c0_i32_0 : i32, i32
  }
  func.func @transform_5(%arg0: i32) -> (i32, i32) {
    %c0_i32 = arith.constant 0 : i32
    %c0_i32_0 = arith.constant 0 : i32
    return %arg0, %c0_i32 : i32, i32
  }
}

</mosaic_0001>

<llo_original>
// kernel: tpu_custom_call.1
$region0: #{tpu_custom_call.1}
  #allocation0 [shape = 'u32[]', space=smem, size = 0x4, offset = 0x4, fixed_abs, tag = 'smem constant byte address 0x4 - core index']
  #allocation1 [shape = 'u32[144,128]{1,0:T(1,128)}', space=vmem, size = 0x12000, scoped, tag = 'internal scratch']
  %s0 = inlined_call_operand.hbm [shape: bf16[32,32], index: 0, kind: input, shape index: {}]
  %s1 = inlined_call_operand.hbm [shape: bf16[32,128], index: 1, kind: input, shape index: {}]
  %s2 = inlined_call_operand.hbm [shape: bf16[32,128], index: 2, kind: input, shape index: {}]
  %s3 = inlined_call_operand.hbm [shape: bf16[256,128], index: 3, kind: input, shape index: {}]
  %s4 = inlined_call_operand.vmem [shape: f32[1,128], index: 4, kind: input, shape index: {}]
  %s5 = inlined_call_operand.hbm [shape: bf16[32,128], index: 5, kind: output, shape index: {}]
  %s6 = sld [smem:[#allocation0]]
  $region46: #{tpu_custom_call.1} parent=0
    _
  %s8 = ssub.s32 1, %s6
  %s9 = scalar_select 0, %s8, %s6
  $region1: #{tpu_custom_call.1} parent=0
    #allocation2 [shape = 'u8[8192]{0}', space=vmem, size = 0x2000, scoped, tag = 'input window, operand 0, single buffered']
    #allocation3 [shape = 's32[1]{0}', space=sflag, size = 0x4, scoped, tag = 'scoped memory for tpu_custom_call.1']
    #allocation4 [shape = 's32[1]{0}', space=sflag, size = 0x4, scoped, tag = 'scoped memory for tpu_custom_call.1']
    #allocation5 [shape = 'u8[8192]{0}', space=vmem, size = 0x2000, scoped, tag = 'input window, operand 1, single buffered']
    #allocation6 [shape = 's32[1]{0}', space=sflag, size = 0x4, scoped, tag = 'scoped memory for tpu_custom_call.1']
    #allocation7 [shape = 'u8[8192]{0}', space=vmem, size = 0x2000, scoped, tag = 'input window, operand 2, single buffered']
    #allocation8 [shape = 'u8[65536]{0}', space=vmem, size = 0x10000, scoped, tag = 'input window, operand 3, single buffered']
    #allocation9 [shape = 's32[1]{0}', space=sflag, size = 0x4, scoped, tag = 'scoped memory for tpu_custom_call.1']
    #allocation10 [shape = 'u8[8192]{0}', space=vmem, size = 0x2000, scoped, tag = 'output window, operand 0, single buffered']
    %10 = vsyncpa [#allocation3], 0
    %11 = vsyncpa [#allocation6], 0
    %12 = vsyncpa [#allocation9], 0
    %13 = vsyncpa [#allocation4], 0
    // Predicated region
    $region2: #{tpu_custom_call.1} parent=1 // pred_check
      _
    $region3: #{tpu_custom_call.1} parent=1 // pred_check_branch
      %15 = sbr.rel (0) target = $region5
    $region4: #{tpu_custom_call.1} parent=1 // pred_region
      %s17 = ssub.s32 256, 256
      %18 = vsyncadd [#allocation3], %s17
      %s19 = sshll.u32 [#allocation2], 4
      %s20 = int_to_ptr.vmem [resolvable:$true] %s19
      %25 = dma.hbm_to_vmem [thread:$0]  %s0, 256, %s20, [#allocation3], 64, 64, 4
    $region5: #{tpu_custom_call.1} parent=1 // pred_fallthru
      _
    // Predicated region
    $region6: #{tpu_custom_call.1} parent=1 // pred_check
      _
    $region7: #{tpu_custom_call.1} parent=1 // pred_check_branch
      %27 = sbr.rel (0) target = $region9
    $region8: #{tpu_custom_call.1} parent=1 // pred_region
      %s29 = ssub.s32 256, 256
      %30 = vsyncadd [#allocation6], %s29
      %s31 = sshll.u32 [#allocation5], 4
      %s32 = int_to_ptr.vmem [resolvable:$true] %s31
      %37 = dma.hbm_to_vmem [thread:$0]  %s1, 256, %s32, [#allocation6], 64, 64, 4
    $region9: #{tpu_custom_call.1} parent=1 // pred_fallthru
      _
    // Predicated region
    $region10: #{tpu_custom_call.1} parent=1 // pred_check
      _
    $region11: #{tpu_custom_call.1} parent=1 // pred_check_branch
      %39 = sbr.rel (0) target = $region13
    $region12: #{tpu_custom_call.1} parent=1 // pred_region
      %s41 = ssub.s32 256, 256
      %42 = vsyncadd [#allocation6], %s41
      %s43 = sshll.u32 [#allocation7], 4
      %s44 = int_to_ptr.vmem [resolvable:$true] %s43
      %49 = dma.hbm_to_vmem [thread:$0]  %s2, 256, %s44, [#allocation6], 64, 64, 4
    $region13: #{tpu_custom_call.1} parent=1 // pred_fallthru
      _
    // Predicated region
    $region14: #{tpu_custom_call.1} parent=1 // pred_check
      _
    $region15: #{tpu_custom_call.1} parent=1 // pred_check_branch
      %51 = sbr.rel (0) target = $region17
    $region16: #{tpu_custom_call.1} parent=1 // pred_region
      %s53 = ssub.s32 2048, 2048
      %54 = vsyncadd [#allocation9], %s53
      %s55 = sshll.u32 [#allocation8], 4
      %s56 = int_to_ptr.vmem [resolvable:$true] %s55
      %61 = dma.hbm_to_vmem [thread:$0]  %s3, 2048, %s56, [#allocation9], 64, 64, 4
    $region17: #{tpu_custom_call.1} parent=1 // pred_fallthru
      _
    // Predicated region
    $region18: #{tpu_custom_call.1} parent=1 // pred_check
      _
    $region19: #{tpu_custom_call.1} parent=1 // pred_check_branch
      %63 = sbr.rel (0) target = $region21
    $region20: #{tpu_custom_call.1} parent=1 // pred_region
      _
    $region21: #{tpu_custom_call.1} parent=1 // pred_fallthru
      _
    // Predicated region
    $region22: #{tpu_custom_call.1} parent=1 // pred_check
      _
    $region23: #{tpu_custom_call.1} parent=1 // pred_check_branch
      %65 = sbr.rel (0) target = $region25
    $region24: #{tpu_custom_call.1} parent=1 // pred_region
      %66 = dma.done [#allocation3], 256
    $region25: #{tpu_custom_call.1} parent=1 // pred_fallthru
      _
    // Predicated region
    $region26: #{tpu_custom_call.1} parent=1 // pred_check
      _
    $region27: #{tpu_custom_call.1} parent=1 // pred_check_branch
      %68 = sbr.rel (0) target = $region29
    $region28: #{tpu_custom_call.1} parent=1 // pred_region
      %69 = dma.done [#allocation6], 256
    $region29: #{tpu_custom_call.1} parent=1 // pred_fallthru
      _
    // Predicated region
    $region30: #{tpu_custom_call.1} parent=1 // pred_check
      _
    $region31: #{tpu_custom_call.1} parent=1 // pred_check_branch
      %71 = sbr.rel (0) target = $region33
    $region32: #{tpu_custom_call.1} parent=1 // pred_region
      %72 = dma.done [#allocation6], 256
    $region33: #{tpu_custom_call.1} parent=1 // pred_fallthru
      _
    // Predicated region
    $region34: #{tpu_custom_call.1} parent=1 // pred_check
      _
    $region35: #{tpu_custom_call.1} parent=1 // pred_check_branch
      %74 = sbr.rel (0) target = $region37
    $region36: #{tpu_custom_call.1} parent=1 // pred_region
      %75 = dma.done [#allocation9], 2048
    $region37: #{tpu_custom_call.1} parent=1 // pred_fallthru
      _
    %v77 = vld [vmem:[#allocation2] sm:$0xf]
    %v78 = vld [vmem:[#allocation2 + $0x4] sm:$0xf]
    %v79 = vld [vmem:[#allocation2 + $0x8] sm:$0xf]
    %v80 = vld [vmem:[#allocation2 + $0xc] sm:$0xf]
    %v81 = vld [vmem:[#allocation5] sm:$0xf]
    %v82 = vld [vmem:[#allocation5 + $0x4] sm:$0xf]
    %v83 = vld [vmem:[#allocation5 + $0x8] sm:$0xf]
    %v84 = vld [vmem:[#allocation5 + $0xc] sm:$0xf]
    %v89 = vunpack.c.l.b16 %v77
    %v90 = vunpack.c.l.b16 %v78
    %v91 = vunpack.c.l.b16 %v79
    %v92 = vunpack.c.l.b16 %v80
    %v93 = vpack.c.b16 %v90, %v89
    %v94 = vpack.c.b16 %v92, %v91
    %v99 = vunpack.c.l.b16 %v81
    %v100 = vunpack.c.l.b16 %v82
    %v101 = vunpack.c.l.b16 %v83
    %v102 = vunpack.c.l.b16 %v84
    %v103 = vpack.c.b16 %v100, %v99
    %v104 = vpack.c.b16 %v102, %v101
    %vm107 = vcmask 261120
    %v109 = vsel %vm107, %v93, 0
    %v112 = vsel %vm107, %v94, 0
    %114 = vmatprep.subr.bf16.mxu0 0
    %115 = vmatpush1.bf16.msra.mxu0 %v103
    %116 = vmatprep.subr.bf16.mxu0 0
    %117 = vmatpush1.bf16.msra.mxu0 %v104
    %118 = vmatprep.subr.bf16.mxu0 0
    %119 = vmatpush1.bf16.msra.mxu0 0
    %120 = vmatprep.subr.bf16.mxu0 0
    %121 = vmatpush1.bf16.msra.mxu0 0
    %122 = vmatprep.subr.bf16.mxu0 0
    %123 = vmatpush1.bf16.msra.mxu0 0
    %124 = vmatprep.subr.bf16.mxu0 0
    %125 = vmatpush1.bf16.msra.mxu0 0
    %126 = vmatprep.subr.bf16.mxu0 0
    %127 = vmatpush1.bf16.msra.mxu0 0
    %128 = vmatprep.subr.bf16.mxu0 0
    %129 = vmatpush1.bf16.msra.mxu0 0
    %130 = vmatprep.subr.bf16.mxu0 0
    %131 = vmatpush1.bf16.msra.mxu0 0
    %132 = vmatprep.subr.bf16.mxu0 0
    %133 = vmatpush1.bf16.msra.mxu0 0
    %134 = vmatprep.subr.bf16.mxu0 0
    %135 = vmatpush1.bf16.msra.mxu0 0
    %136 = vmatprep.subr.bf16.mxu0 0
    %137 = vmatpush1.bf16.msra.mxu0 0
    %138 = vmatprep.subr.bf16.mxu0 0
    %139 = vmatpush1.bf16.msra.mxu0 0
    %140 = vmatprep.subr.bf16.mxu0 0
    %141 = vmatpush1.bf16.msra.mxu0 0
    %142 = vmatprep.subr.bf16.mxu0 0
    %143 = vmatpush1.bf16.msra.mxu0 0
    %144 = vmatprep.subr.bf16.mxu0 0
    %145 = vmatpush1.bf16.msra.mxu0 0
    %146 = vmatprep.mubr.bf16.mxu0 0
    %147 = vmatmul.mubr.bf16.gmra.mrb[0].mxu0 %v109
    %v148 = vpop.f32.mrb[0].mxu0
    %v149 = vadd.f32 0.0, %v148
    %v150 = vpop.f32.mrb[0].mxu0
    %v151 = vpop.f32.mrb[0].mxu0
    %v152 = vadd.f32 0.0, %v151
    %v153 = vpop.f32.mrb[0].mxu0
    %154 = vmatprep.mubr.bf16.mxu0 0
    %155 = vmatmul.mubr.bf16.gmra.mrb[0].mxu0 %v112
    %v156 = vpop.f32.mrb[0].mxu0
    %v157 = vadd.f32 0.0, %v156
    %v158 = vpop.f32.mrb[0].mxu0
    %v159 = vpop.f32.mrb[0].mxu0
    %v160 = vadd.f32 0.0, %v159
    %v161 = vpop.f32.mrb[0].mxu0
    %162 = vdwg.mxu0
    %v163 = vpack.c.bf16 %v152, %v149
    %v164 = vpack.c.bf16 %v160, %v157
    %v165 = vld [vmem:[#allocation7] sm:$0xf]
    %v166 = vld [vmem:[#allocation7 + $0x4] sm:$0xf]
    %v167 = vld [vmem:[#allocation7 + $0x8] sm:$0xf]
    %v168 = vld [vmem:[#allocation7 + $0xc] sm:$0xf]
    %v173 = vunpack.c.l.b16 %v165
    %v174 = vunpack.c.l.b16 %v166
    %v175 = vunpack.c.l.b16 %v167
    %v176 = vunpack.c.l.b16 %v168
    %v177 = vpack.c.b16 %v174, %v173
    %v178 = vpack.c.b16 %v176, %v175
    %v181 = vld [vmem:[#allocation8] sm:$0xf]
    %v182 = vld [vmem:[#allocation8 + $0x4] sm:$0xf]
    %v183 = vld [vmem:[#allocation8 + $0x8] sm:$0xf]
    %v184 = vld [vmem:[#allocation8 + $0xc] sm:$0xf]
    %v185 = vld [vmem:[#allocation8 + $0x10] sm:$0xf]
    %v186 = vld [vmem:[#allocation8 + $0x14] sm:$0xf]
    %v187 = vld [vmem:[#allocation8 + $0x18] sm:$0xf]
    %v188 = vld [vmem:[#allocation8 + $0x1c] sm:$0xf]
    %v189 = vld [vmem:[#allocation8 + $0x20] sm:$0xf]
    %v190 = vld [vmem:[#allocation8 + $0x24] sm:$0xf]
    %v191 = vld [vmem:[#allocation8 + $0x28] sm:$0xf]
    %v192 = vld [vmem:[#allocation8 + $0x2c] sm:$0xf]
    %v193 = vld [vmem:[#allocation8 + $0x30] sm:$0xf]
    %v194 = vld [vmem:[#allocation8 + $0x34] sm:$0xf]
    %v195 = vld [vmem:[#allocation8 + $0x38] sm:$0xf]
    %v196 = vld [vmem:[#allocation8 + $0x3c] sm:$0xf]
    %v197 = vld [vmem:[#allocation8 + $0x40] sm:$0xf]
    %v198 = vld [vmem:[#allocation8 + $0x44] sm:$0xf]
    %v199 = vld [vmem:[#allocation8 + $0x48] sm:$0xf]
    %v200 = vld [vmem:[#allocation8 + $0x4c] sm:$0xf]
    %v201 = vld [vmem:[#allocation8 + $0x50] sm:$0xf]
    %v202 = vld [vmem:[#allocation8 + $0x54] sm:$0xf]
    %v203 = vld [vmem:[#allocation8 + $0x58] sm:$0xf]
    %v204 = vld [vmem:[#allocation8 + $0x5c] sm:$0xf]
    %v205 = vld [vmem:[#allocation8 + $0x60] sm:$0xf]
    %v206 = vld [vmem:[#allocation8 + $0x64] sm:$0xf]
    %v207 = vld [vmem:[#allocation8 + $0x68] sm:$0xf]
    %v208 = vld [vmem:[#allocation8 + $0x6c] sm:$0xf]
    %v209 = vld [vmem:[#allocation8 + $0x70] sm:$0xf]
    %v210 = vld [vmem:[#allocation8 + $0x74] sm:$0xf]
    %v211 = vld [vmem:[#allocation8 + $0x78] sm:$0xf]
    %v212 = vld [vmem:[#allocation8 + $0x7c] sm:$0xf]
    %v213 = vld [vmem:[%s4] sm:$0x1]
    %v215 = vlaneseq
    %v216 = vshrl.u32 %v215, 7
    %v217 = vsub.s32 0, %v216
    %v218 = vrot.slane %v213, %v217
    %v252 = vunpack.c.l.b16 %v181
    %v253 = vunpack.c.l.b16 %v182
    %v254 = vunpack.c.l.b16 %v183
    %v255 = vunpack.c.l.b16 %v184
    %v256 = vunpack.c.l.b16 %v185
    %v257 = vunpack.c.l.b16 %v186
    %v258 = vunpack.c.l.b16 %v187
    %v259 = vunpack.c.l.b16 %v188
    %v260 = vunpack.c.l.b16 %v189
    %v261 = vunpack.c.l.b16 %v190
    %v262 = vunpack.c.l.b16 %v191
    %v263 = vunpack.c.l.b16 %v192
    %v264 = vunpack.c.l.b16 %v193
    %v265 = vunpack.c.l.b16 %v194
    %v266 = vunpack.c.l.b16 %v195
    %v267 = vunpack.c.l.b16 %v196
    %v268 = vunpack.c.l.b16 %v197
    %v269 = vunpack.c.l.b16 %v198
    %v270 = vunpack.c.l.b16 %v199
    %v271 = vunpack.c.l.b16 %v200
    %v272 = vunpack.c.l.b16 %v201
    %v273 = vunpack.c.l.b16 %v202
    %v274 = vunpack.c.l.b16 %v203
    %v275 = vunpack.c.l.b16 %v204
    %v276 = vunpack.c.l.b16 %v205
    %v277 = vunpack.c.l.b16 %v206
    %v278 = vunpack.c.l.b16 %v207
    %v279 = vunpack.c.l.b16 %v208
    %v280 = vunpack.c.l.b16 %v209
    %v281 = vunpack.c.l.b16 %v210
    %v282 = vunpack.c.l.b16 %v211
    %v283 = vunpack.c.l.b16 %v212
    %v284 = vpack.c.b16 %v253, %v252
    %v285 = vpack.c.b16 %v255, %v254
    %v286 = vpack.c.b16 %v257, %v256
    %v287 = vpack.c.b16 %v259, %v258
    %v288 = vpack.c.b16 %v261, %v260
    %v289 = vpack.c.b16 %v263, %v262
    %v290 = vpack.c.b16 %v265, %v264
    %v291 = vpack.c.b16 %v267, %v266
    %v292 = vpack.c.b16 %v269, %v268
    %v293 = vpack.c.b16 %v271, %v270
    %v294 = vpack.c.b16 %v273, %v272
    %v295 = vpack.c.b16 %v275, %v274
    %v296 = vpack.c.b16 %v277, %v276
    %v297 = vpack.c.b16 %v279, %v278
    %v298 = vpack.c.b16 %v281, %v280
    %v299 = vpack.c.b16 %v283, %v282
    %316 = vmatprep.subr.bf16.mxu0 0
    %317 = vmatpush1.bf16.msra.mxu0 %v284
    %318 = vmatprep.subr.bf16.mxu0 0
    %319 = vmatpush1.bf16.msra.mxu0 %v285
    %320 = vmatprep.subr.bf16.mxu0 0
    %321 = vmatpush1.bf16.msra.mxu0 %v286
    %322 = vmatprep.subr.bf16.mxu0 0
    %323 = vmatpush1.bf16.msra.mxu0 %v287
    %324 = vmatprep.subr.bf16.mxu0 0
    %325 = vmatpush1.bf16.msra.mxu0 %v288
    %326 = vmatprep.subr.bf16.mxu0 0
    %327 = vmatpush1.bf16.msra.mxu0 %v289
    %328 = vmatprep.subr.bf16.mxu0 0
    %329 = vmatpush1.bf16.msra.mxu0 %v290
    %330 = vmatprep.subr.bf16.mxu0 0
    %331 = vmatpush1.bf16.msra.mxu0 %v291
    %332 = vmatprep.subr.bf16.mxu0 0
    %333 = vmatpush1.bf16.msra.mxu0 %v292
    %334 = vmatprep.subr.bf16.mxu0 0
    %335 = vmatpush1.bf16.msra.mxu0 %v293
    %336 = vmatprep.subr.bf16.mxu0 0
    %337 = vmatpush1.bf16.msra.mxu0 %v294
    %338 = vmatprep.subr.bf16.mxu0 0
    %339 = vmatpush1.bf16.msra.mxu0 %v295
    %340 = vmatprep.subr.bf16.mxu0 0
    %341 = vmatpush1.bf16.msra.mxu0 %v296
    %342 = vmatprep.subr.bf16.mxu0 0
    %343 = vmatpush1.bf16.msra.mxu0 %v297
    %344 = vmatprep.subr.bf16.mxu0 0
    %345 = vmatpush1.bf16.msra.mxu0 %v298
    %346 = vmatprep.subr.bf16.mxu0 0
    %347 = vmatpush1.bf16.msra.mxu0 %v299
    %348 = vmatprep.mubr.bf16.mxu0 %v177
    %349 = vmatmul.mubr.bf16.gmra.mrb[0].mxu0 %v163
    %v350 = vpop.f32.mrb[0].mxu0
    %v351 = vadd.f32 %v218, %v350
    %v352 = vpop.f32.mrb[0].mxu0
    %v353 = vpop.f32.mrb[0].mxu0
    %v354 = vadd.f32 %v218, %v353
    %v355 = vpop.f32.mrb[0].mxu0
    %356 = vmatprep.mubr.bf16.mxu0 %v178
    %357 = vmatmul.mubr.bf16.gmra.mrb[0].mxu0 %v164
    %v358 = vpop.f32.mrb[0].mxu0
    %v359 = vadd.f32 %v218, %v358
    %v360 = vpop.f32.mrb[0].mxu0
    %v361 = vpop.f32.mrb[0].mxu0
    %v362 = vadd.f32 %v218, %v361
    %v363 = vpop.f32.mrb[0].mxu0
    %364 = vdwg.mxu0
    %v365 = vmax.f32 %v351, 0.0
    %v366 = vmax.f32 %v354, 0.0
    %v367 = vmax.f32 %v359, 0.0
    %v368 = vmax.f32 %v362, 0.0
    %v369 = vpack.c.bf16 %v366, %v365
    %v370 = vpack.c.bf16 %v368, %v367
    %v373 = vunpack.c.l.b16 %v369
    %v374 = vunpack.c.h.b16 %v369
    %v375 = vunpack.c.l.b16 %v370
    %v376 = vunpack.c.h.b16 %v370
    %v377 = vpack.c.b16 %v373, %v373
    %v378 = vpack.c.b16 %v374, %v374
    %v379 = vpack.c.b16 %v375, %v375
    %v380 = vpack.c.b16 %v376, %v376
    %385 = vst [vmem:[#allocation10] sm:$0xf] %v377
    %386 = vst [vmem:[#allocation10 + $0x4] sm:$0xf] %v378
    %387 = vst [vmem:[#allocation10 + $0x8] sm:$0xf] %v379
    %388 = vst [vmem:[#allocation10 + $0xc] sm:$0xf] %v380
    // Predicated region
    $region38: #{tpu_custom_call.1} parent=1 // pred_check
      _
    $region39: #{tpu_custom_call.1} parent=1 // pred_check_branch
      %390 = sbr.rel (0) target = $region41
    $region40: #{tpu_custom_call.1} parent=1 // pred_region
      %s392 = ssub.s32 256, 256
      %393 = vsyncadd [#allocation4], %s392
      %s394 = sshll.u32 [#allocation10], 4
      %s395 = int_to_ptr.vmem [resolvable:$true] %s394
      %400 = dma.vmem_to_hbm [thread:$0]  %s395, 256, %s5, [#allocation4], 64, 64, 4
    $region41: #{tpu_custom_call.1} parent=1 // pred_fallthru
      _
    // Predicated region
    $region42: #{tpu_custom_call.1} parent=1 // pred_check
      _
    $region43: #{tpu_custom_call.1} parent=1 // pred_check_branch
      %402 = sbr.rel (0) target = $region45
    $region44: #{tpu_custom_call.1} parent=1 // pred_region
      %403 = dma.done [#allocation4], 256
    $region45: #{tpu_custom_call.1} parent=1 // pred_fallthru
      _
    %404 = vsyncpa [#allocation3], 1
    %405 = vsyncpa [#allocation6], 1
    %406 = vsyncpa [#allocation9], 1
    %407 = vsyncpa [#allocation4], 1

</llo_original>
